<compile_context>
chip_gen: v7x
topology: tpu7x:2x2x1
jax: 0.10.0
libtpu: 0.0.40
codegen_flags: <defaults>
</compile_context>

<pallas_src>
import functools
import math

import jax
import jax.numpy as jnp
from jax import lax
from jax.experimental import pallas as pl
from jax.experimental.pallas import tpu as pltpu

# BinaryFocalLoss defaults from the PyTorch module
_ALPHA0 = 1.0
_ALPHA1 = 1.0
_SMOOTH = 1e-6

# Feature-tile row budget: 8192 rows x 128 lanes x 4 B = 4 MiB per f32 input
# tile; 2 inputs x 2 pipeline buffers = 16 MiB, within the 48 MiB limit we
# request (and within v7x's 64 MiB physical VMEM).
_TR_MAX = 8192

_CHUNK_ROWS = 8           # one (8,128) vreg per input per inner step
_GROUP_CHUNKS = 4         # static unroll inside the fori_loop body
_GROUP_ROWS = _CHUNK_ROWS * _GROUP_CHUNKS

# per-sample partial-sum slots: inter, m1, m2, pos_raw, neg_raw, num_pos, num_neg
_N_PART = 7


def _dc_focal_partials_kernel(prob_ref, tgt_ref, out_ref, *, tr):
    """One (1, tr, 128) feature block of one sample -> 7 (8,128) partial sums."""
    k = pl.program_id(1)  # feature-block index within the sample

    def step(off, accs):
        """Consume one (8,128) chunk; keep everything in vregs."""
        inter, m1, m2, pos_r, neg_r, npos, nneg = accs
        p = prob_ref[0, pl.ds(off, _CHUNK_ROWS), :].astype(jnp.float32)
        t = tgt_ref[0, pl.ds(off, _CHUNK_ROWS), :].astype(jnp.float32)
        pc = jnp.clip(p, _SMOOTH, 1.0 - _SMOOTH)
        omp = 1.0 - pc
        pos_m = (t == 1.0).astype(jnp.float32)     # exact masks, like PyTorch
        neg_m = (t == 0.0).astype(jnp.float32)
        # gamma == 2 -> explicit squares (only the 2 logs hit the EUP); the
        # -alpha scaling is applied as a scalar in the JAX finalize.
        pos_term = (omp * omp) * jnp.log(pc) * pos_m
        neg_term = (pc * pc) * jnp.log(omp) * neg_m
        return (inter + p * t, m1 + p, m2 + t,
                pos_r + pos_term, neg_r + neg_term,
                npos + pos_m, nneg + neg_m)

    zeros = jnp.zeros((_CHUNK_ROWS, 128), jnp.float32)
    accs = (zeros,) * _N_PART

    n_groups = tr // _GROUP_ROWS
    n_tail = (tr % _GROUP_ROWS) // _CHUNK_ROWS     # tr is a multiple of 8

    def group_body(g, accs):
        base = pl.multiple_of(g * _GROUP_ROWS, _GROUP_ROWS)
        for s in range(_GROUP_CHUNKS):             # static 4x unroll
            accs = step(base + s * _CHUNK_ROWS, accs)
        return accs

    if n_groups > 0:
        accs = lax.fori_loop(0, n_groups, group_body, accs)
    for s in range(n_tail):                        # static tail chunks
        accs = step(n_groups * _GROUP_ROWS + s * _CHUNK_ROWS, accs)

    # Output block is resident across the k axis (index_map ignores k):
    # write on the first block, accumulate on the rest.
    @pl.when(k == 0)
    def _first():
        for j in range(_N_PART):
            out_ref[0, j] = accs[j]

    @pl.when(k != 0)
    def _rest():
        for j in range(_N_PART):
            out_ref[0, j] += accs[j]


def dc_and_focal_loss(net_output, target, lambada=1.0):
    """Pallas TPU implementation of DC_and_Focal_loss.forward."""
    assert net_output.shape == target.shape
    n = net_output.shape[0]
    f = int(math.prod(net_output.shape[1:]))

    # Lane-dense per-sample layout: rows of 128 lanes, rows a multiple of 8.
    r = (f + 127) // 128
    r8 = ((r + 7) // 8) * 8
    nk = (r8 + _TR_MAX - 1) // _TR_MAX             # feature blocks per sample
    tr = (((r8 + nk - 1) // nk) + 7) // 8 * 8      # block rows (<= _TR_MAX)
    r_pad = nk * tr
    f_pad = r_pad * 128

    def to_slab(x):
        x = x.reshape(n, f)
        if f_pad != f:
            # Zero padding: exact 0 contribution to dice / pos terms; padded
            # elements do count as "negatives" but the static pad count is
            # subtracted in the finalize (their neg-loss term is ~1e-18/elem,
            # negligible).  For typical shapes (f multiple of 1024 splitting
            # evenly into nk blocks) this branch is skipped entirely -> no
            # extra HBM copy before the kernel.
            x = jnp.pad(x, ((0, 0), (0, f_pad - f)))
        return x.reshape(n, r_pad, 128)            # native dtype, no f32 upcast

    prob = to_slab(net_output)
    tgt = to_slab(target)

    kernel = functools.partial(_dc_focal_partials_kernel, tr=tr)

    elems = n * f_pad
    cost = pl.CostEstimate(
        flops=22 * elems,
        transcendentals=2 * elems,
        bytes_accessed=elems * (prob.dtype.itemsize + tgt.dtype.itemsize)
        + n * _N_PART * 8 * 128 * 4,
    )

    # TODO(synk): on v5e, if DMA is still exposed at step boundaries, add
    # pipeline_mode=pl.Buffered(3) to the two input BlockSpecs.
    parts = pl.pallas_call(
        kernel,
        out_shape=jax.ShapeDtypeStruct((n, _N_PART, 8, 128), jnp.float32),
        grid=(n, nk),                              # reduction (feature) axis last
        in_specs=[
            pl.BlockSpec((1, tr, 128), lambda i, k: (i, k, 0)),
            pl.BlockSpec((1, tr, 128), lambda i, k: (i, k, 0)),
        ],
        out_specs=pl.BlockSpec((1, _N_PART, 8, 128), lambda i, k: (i, 0, 0, 0)),
        compiler_params=pltpu.CompilerParams(
            # No cross-sample state -> batch axis is safely "parallel"
            # (megacore sharding on v7x; no effect on v5e/v6e).
            dimension_semantics=("parallel", "arbitrary"),
            vmem_limit_bytes=48 * 1024 * 1024,
        ),
        cost_estimate=cost,
    )(prob, tgt)

    # ---- tiny scalar finalize in plain JAX ----
    sums = jnp.sum(parts, axis=(2, 3))             # (n, 7)
    inter, m1, m2 = sums[:, 0], sums[:, 1], sums[:, 2]
    pos_raw = jnp.sum(sums[:, 3])
    neg_raw = jnp.sum(sums[:, 4])
    num_pos = jnp.sum(sums[:, 5])
    num_neg = jnp.sum(sums[:, 6]) - jnp.float32(n * (f_pad - f))  # drop padding

    # SoftDiceLoss
    score = 2.0 * (inter + 1.0) / (m1 + m2 + 1.0)
    dc_loss = jnp.maximum(1.0 - jnp.sum(score) / n, 0.0)

    # BinaryFocalLoss (alpha / sign applied here as scalars)
    pos_loss = -_ALPHA0 * pos_raw
    neg_loss = -_ALPHA1 * neg_raw
    focal = jnp.where(num_pos == 0.0, neg_loss,
                      pos_loss / num_pos + neg_loss / num_neg)
    return lambada * focal + dc_loss


def _reference_loss(net_output, target, lambada=1.0):
    """Plain-JAX reference mirroring the PyTorch semantics."""
    n = net_output.shape[0]
    m1 = net_output.reshape(n, -1).astype(jnp.float32)
    m2 = target.reshape(n, -1).astype(jnp.float32)
    inter = jnp.sum(m1 * m2, axis=1)
    score = 2.0 * (inter + 1.0) / (jnp.sum(m1, 1) + jnp.sum(m2, 1) + 1.0)
    dc_loss = jnp.maximum(1.0 - jnp.sum(score) / n, 0.0)

    p = jnp.clip(m1, _SMOOTH, 1.0 - _SMOOTH)
    pos_mask = (m2 == 1.0).astype(jnp.float32)
    neg_mask = (m2 == 0.0).astype(jnp.float32)
    pos_loss = jnp.sum(-_ALPHA0 * (1.0 - p) ** 2.0 * jnp.log(p) * pos_mask)
    neg_loss = jnp.sum(-_ALPHA1 * p ** 2.0 * jnp.log(1.0 - p) * neg_mask)
    num_pos = jnp.sum(pos_mask)
    num_neg = jnp.sum(neg_mask)
    focal = jnp.where(num_pos == 0.0, neg_loss,
                      pos_loss / num_pos + neg_loss / num_neg)
    return lambada * focal + dc_loss


if __name__ == "__main__":
    key = jax.random.PRNGKey(0)
    k1, k2 = jax.random.split(key)
    # NCHW, small shapes: batch=2, channels=4, spatial=16x16 (C*H*W = 1024)
    net_output = jax.nn.sigmoid(
        jax.random.normal(k1, (2, 4, 16, 16), dtype=jnp.float32))
    target = (jax.random.uniform(k2, (2, 4, 16, 16)) > 0.5).astype(jnp.float32)

    loss = dc_and_focal_loss(net_output, target, lambada=1.0)
    loss = jax.block_until_ready(loss)

    ref = _reference_loss(net_output, target, lambada=1.0)
    assert jnp.allclose(loss, ref, rtol=1e-4, atol=1e-4), (loss, ref)
    print("KERNEL_OK")
</pallas_src>

<mosaic_0001>
module attributes {stable_mosaic.version = 11 : i64} {
  func.func @_dc_focal_partials_kernel(%arg0: i32, %arg1: i32, %arg2: memref<1x8x128xf32, #tpu.memory_space<vmem>>, %arg3: memref<1x8x128xf32, #tpu.memory_space<vmem>>, %arg4: memref<1x7x8x128xf32, #tpu.memory_space<vmem>>) attributes {dimension_semantics = [#tpu.dimension_semantics<parallel>, #tpu.dimension_semantics<arbitrary>], iteration_bounds = array<i64: 2, 1>, scalar_prefetch = 0 : i64, scratch_operands = 0 : i64, tpu.core_type = #tpu.core_type<tc>, window_params = [{transform_indices = @transform_0, window_bounds = array<i64: 1, 8, 128>}, {transform_indices = @transform_1, window_bounds = array<i64: 1, 8, 128>}, {transform_indices = @transform_2, window_bounds = array<i64: 1, 7, 8, 128>}]} {
    %cst = arith.constant 0.000000e+00 : f32
    %0 = vector.broadcast %cst : f32 to vector<8x128xf32>
    %c0 = arith.constant 0 : index
    %c0_0 = arith.constant 0 : index
    %c0_1 = arith.constant 0 : index
    %1 = vector.load %arg2[%c0, %c0_0, %c0_1] : memref<1x8x128xf32, #tpu.memory_space<vmem>>, vector<1x8x128xf32>
    %2 = vector.shape_cast %1 : vector<1x8x128xf32> to vector<8x128xf32>
    %c0_2 = arith.constant 0 : index
    %c0_3 = arith.constant 0 : index
    %c0_4 = arith.constant 0 : index
    %3 = vector.load %arg3[%c0_2, %c0_3, %c0_4] : memref<1x8x128xf32, #tpu.memory_space<vmem>>, vector<1x8x128xf32>
    %4 = vector.shape_cast %3 : vector<1x8x128xf32> to vector<8x128xf32>
    %cst_5 = arith.constant 9.99999997E-7 : f32
    %cst_6 = arith.constant 0.999998986 : f32
    %5 = vector.broadcast %cst_5 : f32 to vector<8x128xf32>
    %6 = arith.maximumf %5, %2 : vector<8x128xf32>
    %7 = vector.broadcast %cst_6 : f32 to vector<8x128xf32>
    %8 = arith.minimumf %7, %6 : vector<8x128xf32>
    %cst_7 = arith.constant 1.000000e+00 : f32
    %9 = vector.broadcast %cst_7 : f32 to vector<8x128xf32>
    %10 = arith.subf %9, %8 : vector<8x128xf32>
    %cst_8 = arith.constant 1.000000e+00 : f32
    %11 = vector.broadcast %cst_8 : f32 to vector<8x128xf32>
    %12 = arith.cmpf oeq, %4, %11 : vector<8x128xf32>
    %13 = arith.extui %12 : vector<8x128xi1> to vector<8x128xi32>
    %14 = arith.sitofp %13 : vector<8x128xi32> to vector<8x128xf32>
    %cst_9 = arith.constant 0.000000e+00 : f32
    %15 = vector.broadcast %cst_9 : f32 to vector<8x128xf32>
    %16 = arith.cmpf oeq, %4, %15 : vector<8x128xf32>
    %17 = arith.extui %16 : vector<8x128xi1> to vector<8x128xi32>
    %18 = arith.sitofp %17 : vector<8x128xi32> to vector<8x128xf32>
    %19 = arith.mulf %10, %10 : vector<8x128xf32>
    %20 = math.log %8 : vector<8x128xf32>
    %21 = arith.mulf %19, %20 : vector<8x128xf32>
    %22 = arith.mulf %21, %14 : vector<8x128xf32>
    %23 = arith.mulf %8, %8 : vector<8x128xf32>
    %24 = math.log %10 : vector<8x128xf32>
    %25 = arith.mulf %23, %24 : vector<8x128xf32>
    %26 = arith.mulf %25, %18 : vector<8x128xf32>
    %27 = arith.mulf %2, %4 : vector<8x128xf32>
    %28 = arith.addf %0, %27 : vector<8x128xf32>
    %29 = arith.addf %0, %2 : vector<8x128xf32>
    %30 = arith.addf %0, %4 : vector<8x128xf32>
    %31 = arith.addf %0, %22 : vector<8x128xf32>
    %32 = arith.addf %0, %26 : vector<8x128xf32>
    %33 = arith.addf %0, %14 : vector<8x128xf32>
    %34 = arith.addf %0, %18 : vector<8x128xf32>
    %c0_i32 = arith.constant 0 : i32
    %35 = arith.cmpi eq, %arg1, %c0_i32 : i32
    %36 = arith.extui %35 : i1 to i32
    %c0_i32_10 = arith.constant 0 : i32
    %37 = arith.cmpi ne, %36, %c0_i32_10 : i32
    scf.if %37 {
      %c0_13 = arith.constant 0 : index
      %c0_14 = arith.constant 0 : index
      %c0_15 = arith.constant 0 : index
      %c0_16 = arith.constant 0 : index
      %41 = vector.load %arg4[%c0_13, %c0_14, %c0_15, %c0_16] : memref<1x7x8x128xf32, #tpu.memory_space<vmem>>, vector<1x1x8x128xf32>
      %42 = vector.shape_cast %41 : vector<1x1x8x128xf32> to vector<8x128xf32>
      %43 = vector.shape_cast %28 : vector<8x128xf32> to vector<1x1x8x128xf32>
      tpu.vector_store %arg4[%c0_13, %c0_14, %c0_15, %c0_16], %43 {strides = array<i32>} : memref<1x7x8x128xf32, #tpu.memory_space<vmem>>, vector<1x1x8x128xf32>,
      %c0_17 = arith.constant 0 : index
      %c1 = arith.constant 1 : index
      %c0_18 = arith.constant 0 : index
      %c0_19 = arith.constant 0 : index
      %44 = vector.load %arg4[%c0_17, %c1, %c0_18, %c0_19] : memref<1x7x8x128xf32, #tpu.memory_space<vmem>>, vector<1x1x8x128xf32>
      %45 = vector.shape_cast %44 : vector<1x1x8x128xf32> to vector<8x128xf32>
      %46 = vector.shape_cast %29 : vector<8x128xf32> to vector<1x1x8x128xf32>
      tpu.vector_store %arg4[%c0_17, %c1, %c0_18, %c0_19], %46 {strides = array<i32>} : memref<1x7x8x128xf32, #tpu.memory_space<vmem>>, vector<1x1x8x128xf32>,
      %c0_20 = arith.constant 0 : index
      %c2 = arith.constant 2 : index
      %c0_21 = arith.constant 0 : index
      %c0_22 = arith.constant 0 : index
      %47 = vector.load %arg4[%c0_20, %c2, %c0_21, %c0_22] : memref<1x7x8x128xf32, #tpu.memory_space<vmem>>, vector<1x1x8x128xf32>
      %48 = vector.shape_cast %47 : vector<1x1x8x128xf32> to vector<8x128xf32>
      %49 = vector.shape_cast %30 : vector<8x128xf32> to vector<1x1x8x128xf32>
      tpu.vector_store %arg4[%c0_20, %c2, %c0_21, %c0_22], %49 {strides = array<i32>} : memref<1x7x8x128xf32, #tpu.memory_space<vmem>>, vector<1x1x8x128xf32>,
      %c0_23 = arith.constant 0 : index
      %c3 = arith.constant 3 : index
      %c0_24 = arith.constant 0 : index
      %c0_25 = arith.constant 0 : index
      %50 = vector.load %arg4[%c0_23, %c3, %c0_24, %c0_25] : memref<1x7x8x128xf32, #tpu.memory_space<vmem>>, vector<1x1x8x128xf32>
      %51 = vector.shape_cast %50 : vector<1x1x8x128xf32> to vector<8x128xf32>
      %52 = vector.shape_cast %31 : vector<8x128xf32> to vector<1x1x8x128xf32>
      tpu.vector_store %arg4[%c0_23, %c3, %c0_24, %c0_25], %52 {strides = array<i32>} : memref<1x7x8x128xf32, #tpu.memory_space<vmem>>, vector<1x1x8x128xf32>,
      %c0_26 = arith.constant 0 : index
      %c4 = arith.constant 4 : index
      %c0_27 = arith.constant 0 : index
      %c0_28 = arith.constant 0 : index
      %53 = vector.load %arg4[%c0_26, %c4, %c0_27, %c0_28] : memref<1x7x8x128xf32, #tpu.memory_space<vmem>>, vector<1x1x8x128xf32>
      %54 = vector.shape_cast %53 : vector<1x1x8x128xf32> to vector<8x128xf32>
      %55 = vector.shape_cast %32 : vector<8x128xf32> to vector<1x1x8x128xf32>
      tpu.vector_store %arg4[%c0_26, %c4, %c0_27, %c0_28], %55 {strides = array<i32>} : memref<1x7x8x128xf32, #tpu.memory_space<vmem>>, vector<1x1x8x128xf32>,
      %c0_29 = arith.constant 0 : index
      %c5 = arith.constant 5 : index
      %c0_30 = arith.constant 0 : index
      %c0_31 = arith.constant 0 : index
      %56 = vector.load %arg4[%c0_29, %c5, %c0_30, %c0_31] : memref<1x7x8x128xf32, #tpu.memory_space<vmem>>, vector<1x1x8x128xf32>
      %57 = vector.shape_cast %56 : vector<1x1x8x128xf32> to vector<8x128xf32>
      %58 = vector.shape_cast %33 : vector<8x128xf32> to vector<1x1x8x128xf32>
      tpu.vector_store %arg4[%c0_29, %c5, %c0_30, %c0_31], %58 {strides = array<i32>} : memref<1x7x8x128xf32, #tpu.memory_space<vmem>>, vector<1x1x8x128xf32>,
      %c0_32 = arith.constant 0 : index
      %c6 = arith.constant 6 : index
      %c0_33 = arith.constant 0 : index
      %c0_34 = arith.constant 0 : index
      %59 = vector.load %arg4[%c0_32, %c6, %c0_33, %c0_34] : memref<1x7x8x128xf32, #tpu.memory_space<vmem>>, vector<1x1x8x128xf32>
      %60 = vector.shape_cast %59 : vector<1x1x8x128xf32> to vector<8x128xf32>
      %61 = vector.shape_cast %34 : vector<8x128xf32> to vector<1x1x8x128xf32>
      tpu.vector_store %arg4[%c0_32, %c6, %c0_33, %c0_34], %61 {strides = array<i32>} : memref<1x7x8x128xf32, #tpu.memory_space<vmem>>, vector<1x1x8x128xf32>,
    } else {
    }
    %c0_i32_11 = arith.constant 0 : i32
    %38 = arith.cmpi ne, %arg1, %c0_i32_11 : i32
    %39 = arith.extui %38 : i1 to i32
    %c0_i32_12 = arith.constant 0 : i32
    %40 = arith.cmpi ne, %39, %c0_i32_12 : i32
    scf.if %40 {
      %c0_13 = arith.constant 0 : index
      %c0_14 = arith.constant 0 : index
      %c0_15 = arith.constant 0 : index
      %c0_16 = arith.constant 0 : index
      %41 = vector.load %arg4[%c0_13, %c0_14, %c0_15, %c0_16] : memref<1x7x8x128xf32, #tpu.memory_space<vmem>>, vector<1x1x8x128xf32>
      %42 = vector.shape_cast %41 : vector<1x1x8x128xf32> to vector<8x128xf32>
      %43 = arith.addf %42, %28 : vector<8x128xf32>
      %c0_17 = arith.constant 0 : index
      %c0_18 = arith.constant 0 : index
      %c0_19 = arith.constant 0 : index
      %c0_20 = arith.constant 0 : index
      %44 = vector.load %arg4[%c0_17, %c0_18, %c0_19, %c0_20] : memref<1x7x8x128xf32, #tpu.memory_space<vmem>>, vector<1x1x8x128xf32>
      %45 = vector.shape_cast %44 : vector<1x1x8x128xf32> to vector<8x128xf32>
      %46 = vector.shape_cast %43 : vector<8x128xf32> to vector<1x1x8x128xf32>
      tpu.vector_store %arg4[%c0_17, %c0_18, %c0_19, %c0_20], %46 {strides = array<i32>} : memref<1x7x8x128xf32, #tpu.memory_space<vmem>>, vector<1x1x8x128xf32>,
      %c0_21 = arith.constant 0 : index
      %c1 = arith.constant 1 : index
      %c0_22 = arith.constant 0 : index
      %c0_23 = arith.constant 0 : index
      %47 = vector.load %arg4[%c0_21, %c1, %c0_22, %c0_23] : memref<1x7x8x128xf32, #tpu.memory_space<vmem>>, vector<1x1x8x128xf32>
      %48 = vector.shape_cast %47 : vector<1x1x8x128xf32> to vector<8x128xf32>
      %49 = arith.addf %48, %29 : vector<8x128xf32>
      %c0_24 = arith.constant 0 : index
      %c1_25 = arith.constant 1 : index
      %c0_26 = arith.constant 0 : index
      %c0_27 = arith.constant 0 : index
      %50 = vector.load %arg4[%c0_24, %c1_25, %c0_26, %c0_27] : memref<1x7x8x128xf32, #tpu.memory_space<vmem>>, vector<1x1x8x128xf32>
      %51 = vector.shape_cast %50 : vector<1x1x8x128xf32> to vector<8x128xf32>
      %52 = vector.shape_cast %49 : vector<8x128xf32> to vector<1x1x8x128xf32>
      tpu.vector_store %arg4[%c0_24, %c1_25, %c0_26, %c0_27], %52 {strides = array<i32>} : memref<1x7x8x128xf32, #tpu.memory_space<vmem>>, vector<1x1x8x128xf32>,
      %c0_28 = arith.constant 0 : index
      %c2 = arith.constant 2 : index
      %c0_29 = arith.constant 0 : index
      %c0_30 = arith.constant 0 : index
      %53 = vector.load %arg4[%c0_28, %c2, %c0_29, %c0_30] : memref<1x7x8x128xf32, #tpu.memory_space<vmem>>, vector<1x1x8x128xf32>
      %54 = vector.shape_cast %53 : vector<1x1x8x128xf32> to vector<8x128xf32>
      %55 = arith.addf %54, %30 : vector<8x128xf32>
      %c0_31 = arith.constant 0 : index
      %c2_32 = arith.constant 2 : index
      %c0_33 = arith.constant 0 : index
      %c0_34 = arith.constant 0 : index
      %56 = vector.load %arg4[%c0_31, %c2_32, %c0_33, %c0_34] : memref<1x7x8x128xf32, #tpu.memory_space<vmem>>, vector<1x1x8x128xf32>
      %57 = vector.shape_cast %56 : vector<1x1x8x128xf32> to vector<8x128xf32>
      %58 = vector.shape_cast %55 : vector<8x128xf32> to vector<1x1x8x128xf32>
      tpu.vector_store %arg4[%c0_31, %c2_32, %c0_33, %c0_34], %58 {strides = array<i32>} : memref<1x7x8x128xf32, #tpu.memory_space<vmem>>, vector<1x1x8x128xf32>,
      %c0_35 = arith.constant 0 : index
      %c3 = arith.constant 3 : index
      %c0_36 = arith.constant 0 : index
      %c0_37 = arith.constant 0 : index
      %59 = vector.load %arg4[%c0_35, %c3, %c0_36, %c0_37] : memref<1x7x8x128xf32, #tpu.memory_space<vmem>>, vector<1x1x8x128xf32>
      %60 = vector.shape_cast %59 : vector<1x1x8x128xf32> to vector<8x128xf32>
      %61 = arith.addf %60, %31 : vector<8x128xf32>
      %c0_38 = arith.constant 0 : index
      %c3_39 = arith.constant 3 : index
      %c0_40 = arith.constant 0 : index
      %c0_41 = arith.constant 0 : index
      %62 = vector.load %arg4[%c0_38, %c3_39, %c0_40, %c0_41] : memref<1x7x8x128xf32, #tpu.memory_space<vmem>>, vector<1x1x8x128xf32>
      %63 = vector.shape_cast %62 : vector<1x1x8x128xf32> to vector<8x128xf32>
      %64 = vector.shape_cast %61 : vector<8x128xf32> to vector<1x1x8x128xf32>
      tpu.vector_store %arg4[%c0_38, %c3_39, %c0_40, %c0_41], %64 {strides = array<i32>} : memref<1x7x8x128xf32, #tpu.memory_space<vmem>>, vector<1x1x8x128xf32>,
      %c0_42 = arith.constant 0 : index
      %c4 = arith.constant 4 : index
      %c0_43 = arith.constant 0 : index
      %c0_44 = arith.constant 0 : index
      %65 = vector.load %arg4[%c0_42, %c4, %c0_43, %c0_44] : memref<1x7x8x128xf32, #tpu.memory_space<vmem>>, vector<1x1x8x128xf32>
      %66 = vector.shape_cast %65 : vector<1x1x8x128xf32> to vector<8x128xf32>
      %67 = arith.addf %66, %32 : vector<8x128xf32>
      %c0_45 = arith.constant 0 : index
      %c4_46 = arith.constant 4 : index
      %c0_47 = arith.constant 0 : index
      %c0_48 = arith.constant 0 : index
      %68 = vector.load %arg4[%c0_45, %c4_46, %c0_47, %c0_48] : memref<1x7x8x128xf32, #tpu.memory_space<vmem>>, vector<1x1x8x128xf32>
      %69 = vector.shape_cast %68 : vector<1x1x8x128xf32> to vector<8x128xf32>
      %70 = vector.shape_cast %67 : vector<8x128xf32> to vector<1x1x8x128xf32>
      tpu.vector_store %arg4[%c0_45, %c4_46, %c0_47, %c0_48], %70 {strides = array<i32>} : memref<1x7x8x128xf32, #tpu.memory_space<vmem>>, vector<1x1x8x128xf32>,
      %c0_49 = arith.constant 0 : index
      %c5 = arith.constant 5 : index
      %c0_50 = arith.constant 0 : index
      %c0_51 = arith.constant 0 : index
      %71 = vector.load %arg4[%c0_49, %c5, %c0_50, %c0_51] : memref<1x7x8x128xf32, #tpu.memory_space<vmem>>, vector<1x1x8x128xf32>
      %72 = vector.shape_cast %71 : vector<1x1x8x128xf32> to vector<8x128xf32>
      %73 = arith.addf %72, %33 : vector<8x128xf32>
      %c0_52 = arith.constant 0 : index
      %c5_53 = arith.constant 5 : index
      %c0_54 = arith.constant 0 : index
      %c0_55 = arith.constant 0 : index
      %74 = vector.load %arg4[%c0_52, %c5_53, %c0_54, %c0_55] : memref<1x7x8x128xf32, #tpu.memory_space<vmem>>, vector<1x1x8x128xf32>
      %75 = vector.shape_cast %74 : vector<1x1x8x128xf32> to vector<8x128xf32>
      %76 = vector.shape_cast %73 : vector<8x128xf32> to vector<1x1x8x128xf32>
      tpu.vector_store %arg4[%c0_52, %c5_53, %c0_54, %c0_55], %76 {strides = array<i32>} : memref<1x7x8x128xf32, #tpu.memory_space<vmem>>, vector<1x1x8x128xf32>,
      %c0_56 = arith.constant 0 : index
      %c6 = arith.constant 6 : index
      %c0_57 = arith.constant 0 : index
      %c0_58 = arith.constant 0 : index
      %77 = vector.load %arg4[%c0_56, %c6, %c0_57, %c0_58] : memref<1x7x8x128xf32, #tpu.memory_space<vmem>>, vector<1x1x8x128xf32>
      %78 = vector.shape_cast %77 : vector<1x1x8x128xf32> to vector<8x128xf32>
      %79 = arith.addf %78, %34 : vector<8x128xf32>
      %c0_59 = arith.constant 0 : index
      %c6_60 = arith.constant 6 : index
      %c0_61 = arith.constant 0 : index
      %c0_62 = arith.constant 0 : index
      %80 = vector.load %arg4[%c0_59, %c6_60, %c0_61, %c0_62] : memref<1x7x8x128xf32, #tpu.memory_space<vmem>>, vector<1x1x8x128xf32>
      %81 = vector.shape_cast %80 : vector<1x1x8x128xf32> to vector<8x128xf32>
      %82 = vector.shape_cast %79 : vector<8x128xf32> to vector<1x1x8x128xf32>
      tpu.vector_store %arg4[%c0_59, %c6_60, %c0_61, %c0_62], %82 {strides = array<i32>} : memref<1x7x8x128xf32, #tpu.memory_space<vmem>>, vector<1x1x8x128xf32>,
    } else {
    }
    return
  }
  func.func @transform_0(%arg0: i32, %arg1: i32) -> (i32, i32, i32) {
    %c0_i32 = arith.constant 0 : i32
    %c0_i32_0 = arith.constant 0 : i32
    return %arg0, %arg1, %c0_i32 : i32, i32, i32
  }
  func.func @transform_1(%arg0: i32, %arg1: i32) -> (i32, i32, i32) {
    %c0_i32 = arith.constant 0 : i32
    %c0_i32_0 = arith.constant 0 : i32
    return %arg0, %arg1, %c0_i32 : i32, i32, i32
  }
  func.func @transform_2(%arg0: i32, %arg1: i32) -> (i32, i32, i32, i32) {
    %c0_i32 = arith.constant 0 : i32
    %c0_i32_0 = arith.constant 0 : i32
    %c0_i32_1 = arith.constant 0 : i32
    %c0_i32_2 = arith.constant 0 : i32
    return %arg0, %c0_i32, %c0_i32_0, %c0_i32_1 : i32, i32, i32, i32
  }
}

</mosaic_0001>

<llo_original>
// kernel: tpu_custom_call.1
$region0: #{tpu_custom_call.1}
  #allocation0 [shape = 'u32[]', space=smem, size = 0x4, offset = 0x4, fixed_abs, tag = 'smem constant byte address 0x4 - core index']
  #allocation1 [shape = 'u32[144,128]{1,0:T(1,128)}', space=vmem, size = 0x12000, scoped, tag = 'internal scratch']
  %s0 = inlined_call_operand.hbm [shape: f32[2,8,128], index: 0, kind: input, shape index: {}]
  %s1 = inlined_call_operand.hbm [shape: f32[2,8,128], index: 1, kind: input, shape index: {}]
  %s2 = inlined_call_operand.hbm [shape: f32[2,7,8,128], index: 2, kind: output, shape index: {}]
  %s3 = sld [smem:[#allocation0]]
  $region57: #{tpu_custom_call.1} parent=0
    _
  %s5 = ssub.s32 1, %s3
  %s6 = scalar_select 0, %s5, %s3
  $region1: #{tpu_custom_call.1} parent=0
    #allocation2 [shape = 'u8[8192]{0}', space=vmem, size = 0x2000, scoped, tag = 'input window, operand 0']
    #allocation3 [shape = 's32[2]{0}', space=sflag, size = 0x8, scoped, tag = 'scoped memory for tpu_custom_call.1']
    #allocation4 [shape = 's32[2]{0}', space=sflag, size = 0x8, scoped, tag = 'scoped memory for tpu_custom_call.1']
    #allocation5 [shape = 'u8[8192]{0}', space=vmem, size = 0x2000, scoped, tag = 'input window, operand 1']
    #allocation6 [shape = 's32[2]{0}', space=sflag, size = 0x8, scoped, tag = 'scoped memory for tpu_custom_call.1']
    #allocation7 [shape = 'u8[57344]{0}', space=vmem, size = 0xe000, scoped, tag = 'output window, operand 0']
    %7 = vsyncpa [#allocation3], 0
    %s8 = scalar_lea.sflag [#allocation3], 1
    %9 = vsyncpa %s8, 0
    %10 = vsyncpa [#allocation6], 0
    %s11 = scalar_lea.sflag [#allocation6], 1
    %12 = vsyncpa %s11, 0
    %13 = vsyncpa [#allocation4], 0
    %s14 = scalar_lea.sflag [#allocation4], 1
    %15 = vsyncpa %s14, 0
    loop: start=0, step=1, limit=4
    $region2: #{tpu_custom_call.1} parent=1 // loop_pre_header
      _
    $region3: #{tpu_custom_call.1} parent=1 // loop_header
      %s17 = sphi 0, %s21
      %p18 = scmp.ge.s32.totalorder %s17, 4
      %s24 = sphi 0, %s36
      %s25 = sphi 0, %s32
      %s26 = sphi 0, %s24
      %s27 = sphi 0, %s25
      %s28 = sphi 0, %s26
      %s29 = sphi 0, %s27
      %s41 = sphi 0, %s43
      %s44 = sphi 0, %s41
      %s45 = sphi 0, %s44
      %s61 = sphi 0, %s45
      %s69 = sphi 0, %s71
      %s72 = sphi 0, %s69
      %s73 = sphi 0, %s72
      %s89 = sphi 0, %s73
      %s95 = sphi 0, %s97
      %s98 = sphi 0, %s95
      %s99 = sphi 0, %s98
      %s115 = sphi 0, %s99
    $region4: #{tpu_custom_call.1} parent=1 // loop_header_branch
      %20 = sbr.rel (%p18) target = $region8
    $region5: #{tpu_custom_call.1} parent=1 // loop_body
      %s22 = ssub.s32 %s17, 1
      %s23 = ssub.s32 %s17, 2
      %s30 = sadd.s32 1, %s25
      %p31 = scmp.ge.s32.totalorder %s30, 1
      %s32 = scalar_select %p31, 0, %s30
      %s33 = sadd.s32 1, %s24
      %s34 = scalar_select %p31, %s33, %s24
      %p35 = scmp.ge.s32.totalorder %s34, 2
      %s36 = scalar_select %p35, 0, %s34
      %s37 = ssub.s32 %s24, %s36
      %s38 = ssub.s32 %s25, %s32
      %s39 = sor.u32 %s37, %s38
      %p40 = scmp.eq.s32.totalorder %s39, 0
      %s42 = sadd.s32 %s41, 1
      %s43 = scalar_select %p40, %s41, %s42
      %p46 = pneg %p40
      %p47 = scmp.eq.s32.totalorder %s17, 1
      %p48 = por %p46, %p47
      %p49 = scmp.ne.s32.totalorder %s41, %s44
      %p50 = scmp.eq.s32.totalorder %s17, 0
      %p51 = por %p49, %p50
      %p52 = scmp.ne.s32.totalorder %s41, %s44
      %p53 = scmp.eq.s32.totalorder %s22, 1
      %p54 = por %p52, %p53
      %p55 = scmp.ne.s32.totalorder %s44, %s45
      %p56 = scmp.eq.s32.totalorder %s22, 0
      %p57 = por %p55, %p56
      %p58 = scmp.ne.s32.totalorder %s44, %s45
      %p59 = scmp.eq.s32.totalorder %s23, 1
      %p60 = por %p58, %p59
      %p62 = scmp.ne.s32.totalorder %s45, %s61
      %p63 = scmp.eq.s32.totalorder %s23, 0
      %p64 = por %p62, %p63
      %s65 = ssub.s32 %s24, %s36
      %s66 = ssub.s32 %s25, %s32
      %s67 = sor.u32 %s65, %s66
      %p68 = scmp.eq.s32.totalorder %s67, 0
      %s70 = sadd.s32 %s69, 1
      %s71 = scalar_select %p68, %s69, %s70
      %p74 = pneg %p68
      %p75 = scmp.eq.s32.totalorder %s17, 1
      %p76 = por %p74, %p75
      %p77 = scmp.ne.s32.totalorder %s69, %s72
      %p78 = scmp.eq.s32.totalorder %s17, 0
      %p79 = por %p77, %p78
      %p80 = scmp.ne.s32.totalorder %s69, %s72
      %p81 = scmp.eq.s32.totalorder %s22, 1
      %p82 = por %p80, %p81
      %p83 = scmp.ne.s32.totalorder %s72, %s73
      %p84 = scmp.eq.s32.totalorder %s22, 0
      %p85 = por %p83, %p84
      %p86 = scmp.ne.s32.totalorder %s72, %s73
      %p87 = scmp.eq.s32.totalorder %s23, 1
      %p88 = por %p86, %p87
      %p90 = scmp.ne.s32.totalorder %s73, %s89
      %p91 = scmp.eq.s32.totalorder %s23, 0
      %p92 = por %p90, %p91
      %s93 = ssub.s32 %s24, %s36
      %p94 = scmp.eq.s32.totalorder %s93, 0
      %s96 = sadd.s32 %s95, 1
      %s97 = scalar_select %p94, %s95, %s96
      %p100 = pneg %p94
      %p101 = scmp.eq.s32.totalorder %s17, 1
      %p102 = por %p100, %p101
      %p103 = scmp.ne.s32.totalorder %s95, %s98
      %p104 = scmp.eq.s32.totalorder %s17, 0
      %p105 = por %p103, %p104
      %p106 = scmp.ne.s32.totalorder %s95, %s98
      %p107 = scmp.eq.s32.totalorder %s22, 1
      %p108 = por %p106, %p107
      %p109 = scmp.ne.s32.totalorder %s98, %s99
      %p110 = scmp.eq.s32.totalorder %s22, 0
      %p111 = por %p109, %p110
      %p112 = scmp.ne.s32.totalorder %s98, %s99
      %p113 = scmp.eq.s32.totalorder %s23, 1
      %p114 = por %p112, %p113
      %p116 = scmp.ne.s32.totalorder %s99, %s115
      %p117 = scmp.eq.s32.totalorder %s23, 0
      %p118 = por %p116, %p117
      %p119 = scmp.le.s32.totalorder 1, %s17
      %p120 = scmp.lt.s32.totalorder %s17, 3
      %p121 = pnand %p119, %p120
      %p122 = pneg %p121
      // Predicated region
      $region9: #{tpu_custom_call.1} parent=5 // pred_check
        _
      $region10: #{tpu_custom_call.1} parent=5 // pred_check_branch
        %124 = sbr.rel (%p121) target = $region12
      $region11: #{tpu_custom_call.1} parent=5 // pred_region
        %s125 = ssub.s32 %s17, 1
      $region12: #{tpu_custom_call.1} parent=5 // pred_fallthru
        _
      %p126 = scmp.lt.s32.totalorder %s17, 2
      // Predicated region
      $region13: #{tpu_custom_call.1} parent=5 // pred_check
        %p127 = pneg %p126
      $region14: #{tpu_custom_call.1} parent=5 // pred_check_branch
        %129 = sbr.rel (%p127) target = $region16
      $region15: #{tpu_custom_call.1} parent=5 // pred_region
        // Predicated region
        $region17: #{tpu_custom_call.1} parent=15 // pred_check
          %p130 = pneg %p51
        $region18: #{tpu_custom_call.1} parent=15 // pred_check_branch
          %132 = sbr.rel (%p130) target = $region20
        $region19: #{tpu_custom_call.1} parent=15 // pred_region
          %s133 = sand.u32 %s41, 1
          %s134 = scalar_lea.sflag [#allocation3], %s133
          %s135 = sand.u32 %s41, 1
          %s136 = smul.addr %s135, 8
          %s137 = scalar_lea.vmem [#allocation2], %s136
          %s139 = ssub.s32 128, 128
          %140 = vsyncadd %s134, %s139
          %s141 = sadd.s32 %s25, %s24
          %s142 = smul.addr %s141, 128
          %s143 = scalar_lea.hbm %s0, %s142
          %s145 = sshll.u32 %s137, 4
          %s146 = int_to_ptr.vmem [resolvable:$true] %s145
          %148 = dma.hbm_to_vmem [thread:$0]  %s143, 128, %s146, %s134
        $region20: #{tpu_custom_call.1} parent=15 // pred_fallthru
          _
        // Predicated region
        $region21: #{tpu_custom_call.1} parent=15 // pred_check
          %p149 = pneg %p79
        $region22: #{tpu_custom_call.1} parent=15 // pred_check_branch
          %151 = sbr.rel (%p149) target = $region24
        $region23: #{tpu_custom_call.1} parent=15 // pred_region
          %s152 = sand.u32 %s69, 1
          %s153 = scalar_lea.sflag [#allocation6], %s152
          %s154 = sand.u32 %s69, 1
          %s155 = smul.addr %s154, 8
          %s156 = scalar_lea.vmem [#allocation5], %s155
          %s158 = ssub.s32 128, 128
          %159 = vsyncadd %s153, %s158
          %s160 = sadd.s32 %s25, %s24
          %s161 = smul.addr %s160, 128
          %s162 = scalar_lea.hbm %s1, %s161
          %s164 = sshll.u32 %s156, 4
          %s165 = int_to_ptr.vmem [resolvable:$true] %s164
          %167 = dma.hbm_to_vmem [thread:$0]  %s162, 128, %s165, %s153
        $region24: #{tpu_custom_call.1} parent=15 // pred_fallthru
          _
      $region16: #{tpu_custom_call.1} parent=5 // pred_fallthru
        _
      %p168 = scmp.le.s32.totalorder 1, %s17
      %p169 = scmp.lt.s32.totalorder %s17, 3
      %p170 = pnand %p168, %p169
      %p171 = pneg %p170
      // Predicated region
      $region25: #{tpu_custom_call.1} parent=5 // pred_check
        _
      $region26: #{tpu_custom_call.1} parent=5 // pred_check_branch
        %173 = sbr.rel (%p170) target = $region28
      $region27: #{tpu_custom_call.1} parent=5 // pred_region
        %s174 = ssub.s32 %s17, 1
        %s175 = sand.u32 %s44, 1
        %s176 = scalar_lea.sflag [#allocation3], %s175
        %s177 = sand.u32 %s44, 1
        %s178 = smul.addr %s177, 8
        %s179 = scalar_lea.vmem [#allocation2], %s178
        // Predicated region
        $region29: #{tpu_custom_call.1} parent=27 // pred_check
          %p180 = pneg %p57
        $region30: #{tpu_custom_call.1} parent=27 // pred_check_branch
          %182 = sbr.rel (%p180) target = $region32
        $region31: #{tpu_custom_call.1} parent=27 // pred_region
          %183 = dma.done %s176, 128
        $region32: #{tpu_custom_call.1} parent=27 // pred_fallthru
          _
        %s184 = sand.u32 %s72, 1
        %s185 = scalar_lea.sflag [#allocation6], %s184
        %s186 = sand.u32 %s72, 1
        %s187 = smul.addr %s186, 8
        %s188 = scalar_lea.vmem [#allocation5], %s187
        // Predicated region
        $region33: #{tpu_custom_call.1} parent=27 // pred_check
          %p189 = pneg %p85
        $region34: #{tpu_custom_call.1} parent=27 // pred_check_branch
          %191 = sbr.rel (%p189) target = $region36
        $region35: #{tpu_custom_call.1} parent=27 // pred_region
          %192 = dma.done %s185, 128
        $region36: #{tpu_custom_call.1} parent=27 // pred_fallthru
          _
        %s193 = sand.u32 %s44, 1
        %s194 = scalar_lea.sflag [#allocation3], %s193
        %s195 = sand.u32 %s44, 1
        %s196 = smul.addr %s195, 8
        %s197 = scalar_lea.vmem [#allocation2], %s196
        %p198 = pneg %p57
        %p199 = pneg %p54
        %s200 = sand.u32 %s72, 1
        %s201 = scalar_lea.sflag [#allocation6], %s200
        %s202 = sand.u32 %s72, 1
        %s203 = smul.addr %s202, 8
        %s204 = scalar_lea.vmem [#allocation5], %s203
        %p205 = pneg %p85
        %p206 = pneg %p82
        %p207 = pneg %p111
        %p208 = pneg %p108
        %s209 = sand.u32 %s98, 1
        %s210 = scalar_lea.sflag [#allocation4], %s209
        %s211 = sand.u32 %s98, 1
        %s212 = smul.addr %s211, 56
        %s213 = scalar_lea.vmem [#allocation7], %s212
        %v214 = vld [vmem:[%s179] sm:$0xff]
        %v215 = vld [vmem:[%s188] sm:$0xff]
        %v216 = vmax.f32 %v214, 1e-06
        %v217 = vmin.f32 %v216, 0.999999
        %v218 = vsub.f32 1.0, %v217
        %vm219 = vcmp.eq.f32.partialorder %v215, 1.0
        %v220 = vsel %vm219, 1, 0
        %v221 = vcvt.s32.f32 %v220
        %vm222 = vcmp.eq.f32.partialorder %v215, 0.0
        %v223 = vsel %vm222, 1, 0
        %v224 = vcvt.s32.f32 %v223
        %v225 = vmul.f32 %v218, %v218
        %v226 = vlog2.pop %v217
        %v227 = vmul.f32 %v226, 0.6931472
        %v228 = vmul.f32 %v225, %v227
        %v229 = vmul.f32 %v228, %v221
        %v230 = vmul.f32 %v217, %v217
        %v231 = vlog2.pop %v218
        %v232 = vmul.f32 %v231, 0.6931472
        %v233 = vmul.f32 %v230, %v232
        %v234 = vmul.f32 %v233, %v224
        %v235 = vmul.f32 %v214, %v215
        %v236 = vadd.f32 %v235, 0.0
        %v237 = vadd.f32 %v214, 0.0
        %v238 = vadd.f32 %v215, 0.0
        %v239 = vadd.f32 %v229, 0.0
        %v240 = vadd.f32 %v234, 0.0
        %v241 = vadd.f32 %v221, 0.0
        %v242 = vadd.f32 %v224, 0.0
        %p243 = scmp.eq.s32.totalorder %s27, 0
        // Predicated region
        $region37: #{tpu_custom_call.1} parent=27 // pred_check
          %p244 = pneg %p243
        $region38: #{tpu_custom_call.1} parent=27 // pred_check_branch
          %246 = sbr.rel (%p244) target = $region40
        $region39: #{tpu_custom_call.1} parent=27 // pred_region
          %247 = vst [vmem:[%s213] sm:$0xff] %v236
          %s248 = scalar_lea.vmem %s213, 8 [#allocation7]
          %249 = vst [vmem:[%s248] sm:$0xff] %v237
          %s250 = scalar_lea.vmem %s213, 16 [#allocation7]
          %251 = vst [vmem:[%s250] sm:$0xff] %v238
          %s252 = scalar_lea.vmem %s213, 24 [#allocation7]
          %253 = vst [vmem:[%s252] sm:$0xff] %v239
          %s254 = scalar_lea.vmem %s213, 32 [#allocation7]
          %255 = vst [vmem:[%s254] sm:$0xff] %v240
          %s256 = scalar_lea.vmem %s213, 40 [#allocation7]
          %257 = vst [vmem:[%s256] sm:$0xff] %v241
          %s258 = scalar_lea.vmem %s213, 48 [#allocation7]
          %259 = vst [vmem:[%s258] sm:$0xff] %v242
        $region40: #{tpu_custom_call.1} parent=27 // pred_fallthru
          _
        %p260 = scmp.ne.s32.totalorder %s27, 0
        // Predicated region
        $region41: #{tpu_custom_call.1} parent=27 // pred_check
          %p261 = pneg %p260
        $region42: #{tpu_custom_call.1} parent=27 // pred_check_branch
          %263 = sbr.rel (%p261) target = $region44
        $region43: #{tpu_custom_call.1} parent=27 // pred_region
          %v264 = vld [vmem:[%s213] sm:$0xff]
          %v265 = vadd.f32 %v264, %v236
          %266 = vst [vmem:[%s213] sm:$0xff] %v265
          %s267 = scalar_lea.vmem %s213, 8 [#allocation7]
          %v268 = vld [vmem:[%s267] sm:$0xff]
          %v269 = vadd.f32 %v268, %v237
          %270 = vst [vmem:[%s267] sm:$0xff] %v269
          %s271 = scalar_lea.vmem %s213, 16 [#allocation7]
          %v272 = vld [vmem:[%s271] sm:$0xff]
          %v273 = vadd.f32 %v272, %v238
          %274 = vst [vmem:[%s271] sm:$0xff] %v273
          %s275 = scalar_lea.vmem %s213, 24 [#allocation7]
          %v276 = vld [vmem:[%s275] sm:$0xff]
          %v277 = vadd.f32 %v276, %v239
          %278 = vst [vmem:[%s275] sm:$0xff] %v277
          %s279 = scalar_lea.vmem %s213, 32 [#allocation7]
          %v280 = vld [vmem:[%s279] sm:$0xff]
          %v281 = vadd.f32 %v280, %v240
          %282 = vst [vmem:[%s279] sm:$0xff] %v281
          %s283 = scalar_lea.vmem %s213, 40 [#allocation7]
          %v284 = vld [vmem:[%s283] sm:$0xff]
          %v285 = vadd.f32 %v284, %v241
          %286 = vst [vmem:[%s283] sm:$0xff] %v285
          %s287 = scalar_lea.vmem %s213, 48 [#allocation7]
          %v288 = vld [vmem:[%s287] sm:$0xff]
          %v289 = vadd.f32 %v288, %v242
          %290 = vst [vmem:[%s287] sm:$0xff] %v289
        $region44: #{tpu_custom_call.1} parent=27 // pred_fallthru
          _
        %s291 = sand.u32 %s98, 1
        %s292 = scalar_lea.sflag [#allocation4], %s291
        %s293 = sand.u32 %s98, 1
        %s294 = smul.addr %s293, 56
        %s295 = scalar_lea.vmem [#allocation7], %s294
        // Predicated region
        $region45: #{tpu_custom_call.1} parent=27 // pred_check
          %p296 = pneg %p108
        $region46: #{tpu_custom_call.1} parent=27 // pred_check_branch
          %298 = sbr.rel (%p296) target = $region48
        $region47: #{tpu_custom_call.1} parent=27 // pred_region
          %s300 = ssub.s32 896, 896
          %301 = vsyncadd %s292, %s300
          %s302 = smul.addr %s26, 7
          %s303 = smul.addr %s302, 128
          %s304 = scalar_lea.hbm %s2, %s303
          %s305 = sshll.u32 %s295, 4
          %s306 = int_to_ptr.vmem [resolvable:$true] %s305
          %311 = dma.vmem_to_hbm [thread:$0]  %s306, 896, %s304, %s292, 128, 128, 8
        $region48: #{tpu_custom_call.1} parent=27 // pred_fallthru
          _
      $region28: #{tpu_custom_call.1} parent=5 // pred_fallthru
        _
      %p312 = scmp.le.s32.totalorder 2, %s17
      // Predicated region
      $region49: #{tpu_custom_call.1} parent=5 // pred_check
        %p313 = pneg %p312
      $region50: #{tpu_custom_call.1} parent=5 // pred_check_branch
        %315 = sbr.rel (%p313) target = $region52
      $region51: #{tpu_custom_call.1} parent=5 // pred_region
        %s316 = ssub.s32 %s17, 2
        // Predicated region
        $region53: #{tpu_custom_call.1} parent=51 // pred_check
          %p317 = pneg %p114
        $region54: #{tpu_custom_call.1} parent=51 // pred_check_branch
          %319 = sbr.rel (%p317) target = $region56
        $region55: #{tpu_custom_call.1} parent=51 // pred_region
          %s320 = sand.u32 %s99, 1
          %s321 = scalar_lea.sflag [#allocation4], %s320
          %s322 = sand.u32 %s99, 1
          %s323 = smul.addr %s322, 56
          %s324 = scalar_lea.vmem [#allocation7], %s323
          %325 = dma.done %s321, 896
        $region56: #{tpu_custom_call.1} parent=51 // pred_fallthru
          _
      $region52: #{tpu_custom_call.1} parent=5 // pred_fallthru
        _
    $region6: #{tpu_custom_call.1} parent=1 // loop_footer
      %s21 = sadd.s32 1, %s17
    $region7: #{tpu_custom_call.1} parent=1 // loop_footer_branch
      %16 = sbr.rel target = $region3
    $region8: #{tpu_custom_call.1} parent=1 // loop_exit
      _
    %326 = vsyncpa [#allocation3], 1
    %s327 = scalar_lea.sflag [#allocation3], 1
    %328 = vsyncpa %s327, 1
    %329 = vsyncpa [#allocation6], 1
    %s330 = scalar_lea.sflag [#allocation6], 1
    %331 = vsyncpa %s330, 1
    %332 = vsyncpa [#allocation4], 1
    %s333 = scalar_lea.sflag [#allocation4], 1
    %334 = vsyncpa %s333, 1

</llo_original>
